<compile_context>
chip_gen: v7x
topology: tpu7x:2x2x1
jax: 0.10.0
libtpu: 0.0.40
codegen_flags: <defaults>
</compile_context>

<pallas_src>
import functools

import jax
import jax.numpy as jnp
from jax import lax
from jax.experimental import pallas as pl
from jax.experimental.pallas import tpu as pltpu


def _gnn_kernel(ai_row_ref, ai_col_ref, aj_col_ref, x_ref, w_ref, b_ref,
                out_ref, xw_ref, acc_ref, deg_ref):
    i = pl.program_id(0)                 # output-row (node) tile  -> "parallel"
    k = pl.program_id(1)                 # edge tile (reduction)   -> "arbitrary"

    n_pad, fin = x_ref.shape
    tn, fout_pad = out_ref.shape
    te = ai_row_ref.shape[1]

    # Start of a reduction sweep for this node tile: zero accumulators and
    # (re)compute the node-level projections XW = [x @ W_i ; x @ W_j].
    # (Recomputed per node tile; it is tiny: 2 * N_pad x Fout_pad.)
    @pl.when(k == 0)
    def _():
        acc_ref[...] = jnp.zeros_like(acc_ref)
        deg_ref[...] = jnp.zeros_like(deg_ref)
        xw_ref[:n_pad, :] = jnp.dot(x_ref[...], w_ref[:fin, :],
                                    preferred_element_type=jnp.float32)
        xw_ref[n_pad:, :] = jnp.dot(x_ref[...], w_ref[fin:, :],
                                    preferred_element_type=jnp.float32)

    ai_col = ai_col_ref[...]             # [TE, 1] int32 (-1 on padded edges)
    aj_col = aj_col_ref[...]             # [TE, 1] int32
    ai_row = ai_row_ref[...]             # [1, TE] int32

    # Fused gather + Linear (minus bias): one-hot over the stacked node axis
    # [Ai ; Aj + N_pad] selects x[Ai] @ W_i + x[Aj] @ W_j in a single
    # K = 2*N_pad MXU matmul.  Padded edges (-1) select nothing.
    col = lax.broadcasted_iota(jnp.int32, (te, 2 * n_pad), 1)
    sel = jnp.logical_or(col == ai_col, col == aj_col + n_pad)
    sel = sel.astype(jnp.float32)                                   # [TE, 2*N_pad]
    msg = jnp.dot(sel, xw_ref[...],
                  preferred_element_type=jnp.float32)               # [TE, Fout_pad]

    # Scatter-sum over Ai into this node tile's rows, again on the MXU.
    # Padded edges have Ai = -1 -> all-zero column -> no contribution (even if
    # their msg row is garbage) and no bias leakage via deg.
    rows = lax.broadcasted_iota(jnp.int32, (tn, te), 0) + i * tn
    scat = (rows == ai_row).astype(jnp.float32)                     # [TN, TE]
    acc_ref[...] += jnp.dot(scat, msg,
                            preferred_element_type=jnp.float32)
    deg_ref[...] += jnp.sum(scat, axis=1, keepdims=True)            # [TN, 1]

    # Finalize: each real edge contributes bias once to its destination row.
    @pl.when(k == pl.num_programs(1) - 1)
    def _():
        out_ref[...] = acc_ref[...] + deg_ref[...] * b_ref[...]


def _round_up(v, m):
    return (v + m - 1) // m * m


def gnn_forward(x, ai, aj, weight, bias, *, dim_size, edge_tile=256,
                node_tile=256):
    """x: [N, Fin] f32, ai/aj: [E] int, weight: [Fout, 2*Fin], bias: [Fout].

    dim_size: static number of output rows (== Ai.max()+1 for torch_scatter's
    default); passing it statically keeps the whole forward jittable.
    """
    n, fin = x.shape
    e = ai.shape[0]
    fout = weight.shape[0]
    assert weight.shape[1] == 2 * fin

    n_out = int(dim_size)

    # Padded / tiled sizes: Fout lane-dense (x128), nodes sublane-aligned (x8),
    # edges padded to the edge tile with a -1 sentinel.
    n_pad = _round_up(n, 8)
    fout_pad = _round_up(fout, 128)
    tn = min(_round_up(n_out, 8), node_tile)
    n_out_pad = _round_up(n_out, tn)
    te = min(edge_tile, _round_up(e, 128))
    e_pad = _round_up(e, te)

    x_p = jnp.zeros((n_pad, fin), jnp.float32).at[:n, :].set(
        x.astype(jnp.float32))
    w_p = jnp.zeros((2 * fin, fout_pad), jnp.float32).at[:, :fout].set(
        weight.T.astype(jnp.float32))
    b_p = jnp.zeros((1, fout_pad), jnp.float32).at[0, :fout].set(
        bias.astype(jnp.float32))
    ai_p = jnp.full((e_pad,), -1, jnp.int32).at[:e].set(ai.astype(jnp.int32))
    aj_p = jnp.full((e_pad,), -1, jnp.int32).at[:e].set(aj.astype(jnp.int32))
    ai_row = ai_p.reshape(1, e_pad)
    ai_col = ai_p.reshape(e_pad, 1)
    aj_col = aj_p.reshape(e_pad, 1)

    gi = n_out_pad // tn
    gk = e_pad // te

    flops = 2 * gi * (gk * (te * 2 * n_pad * fout_pad + tn * te * fout_pad)
                      + 2 * n_pad * fin * fout_pad)
    bytes_accessed = 4 * (n_pad * fin + 2 * fin * fout_pad + fout_pad
                          + n_out_pad * fout_pad + 3 * e_pad * gi)

    out = pl.pallas_call(
        _gnn_kernel,
        out_shape=jax.ShapeDtypeStruct((n_out_pad, fout_pad), jnp.float32),
        grid=(gi, gk),
        in_specs=[
            pl.BlockSpec((1, te), lambda i, k: (0, k)),            # Ai (row form)
            pl.BlockSpec((te, 1), lambda i, k: (k, 0)),            # Ai (col form)
            pl.BlockSpec((te, 1), lambda i, k: (k, 0)),            # Aj (col form)
            pl.BlockSpec((n_pad, fin), lambda i, k: (0, 0)),       # x (resident)
            pl.BlockSpec((2 * fin, fout_pad), lambda i, k: (0, 0)),# W fused
            pl.BlockSpec((1, fout_pad), lambda i, k: (0, 0)),      # bias
        ],
        out_specs=pl.BlockSpec((tn, fout_pad), lambda i, k: (i, 0)),
        scratch_shapes=[
            pltpu.VMEM((2 * n_pad, fout_pad), jnp.float32),        # XW
            pltpu.VMEM((tn, fout_pad), jnp.float32),               # accumulator
            pltpu.VMEM((tn, 1), jnp.float32),                      # degree
        ],
        compiler_params=pltpu.CompilerParams(
            dimension_semantics=("parallel", "arbitrary"),
            vmem_limit_bytes=32 * 1024 * 1024,                     # safe on v5e/v6e/v7x
        ),
        cost_estimate=pl.CostEstimate(flops=flops, transcendentals=0,
                                      bytes_accessed=bytes_accessed),
    )(ai_row, ai_col, aj_col, x_p, w_p, b_p)

    return out[:n_out, :fout]


def _reference(x, ai, aj, weight, bias, n_out):
    x_ij = jnp.concatenate([x[ai], x[aj]], axis=1)
    msg = jnp.dot(x_ij, weight.T, precision=lax.Precision.HIGHEST) + bias
    return jnp.zeros((n_out, msg.shape[1]), jnp.float32).at[ai].add(msg)


if __name__ == "__main__":
    # Small deterministic example.
    in_features = 16
    out_features = 32
    n_nodes = 8
    n_edges = 24

    key = jax.random.PRNGKey(0)
    k_x, k_ai, k_aj, k_w, k_b = jax.random.split(key, 5)

    x = jax.random.normal(k_x, (n_nodes, in_features), dtype=jnp.float32)
    ai = jax.random.randint(k_ai, (n_edges,), 0, n_nodes, dtype=jnp.int32)
    aj = jax.random.randint(k_aj, (n_edges,), 0, n_nodes, dtype=jnp.int32)

    # torch.nn.Linear-style init: U(-1/sqrt(fan_in), 1/sqrt(fan_in)).
    fan_in = 2 * in_features
    bound = 1.0 / (fan_in ** 0.5)
    weight = jax.random.uniform(k_w, (out_features, 2 * in_features),
                                minval=-bound, maxval=bound, dtype=jnp.float32)
    bias = jax.random.uniform(k_b, (out_features,),
                              minval=-bound, maxval=bound, dtype=jnp.float32)

    # torch_scatter's default dim_size = Ai.max() + 1, resolved once as test
    # setup (outside the jitted forward, which takes it as a static arg).
    n_out = int(jax.device_get(jnp.max(ai))) + 1

    fwd = jax.jit(functools.partial(gnn_forward, dim_size=n_out))
    out = jax.block_until_ready(fwd(x, ai, aj, weight, bias))

    ref = jax.block_until_ready(_reference(x, ai, aj, weight, bias, n_out))
    assert out.shape == ref.shape, (out.shape, ref.shape)
    assert jnp.allclose(out, ref, atol=1e-4, rtol=1e-4), "mismatch vs reference"

    print("KERNEL_OK")
</pallas_src>

<mosaic_0001>
module attributes {stable_mosaic.version = 11 : i64} {
  func.func @_gnn_kernel(%arg0: i32, %arg1: i32, %arg2: memref<1x128xi32, #tpu.memory_space<vmem>>, %arg3: memref<128x1xi32, #tpu.memory_space<vmem>>, %arg4: memref<128x1xi32, #tpu.memory_space<vmem>>, %arg5: memref<8x16xf32, #tpu.memory_space<vmem>>, %arg6: memref<32x128xf32, #tpu.memory_space<vmem>>, %arg7: memref<1x128xf32, #tpu.memory_space<vmem>>, %arg8: memref<8x128xf32, #tpu.memory_space<vmem>>, %arg9: memref<16x128xf32, #tpu.memory_space<vmem>>, %arg10: memref<8x128xf32, #tpu.memory_space<vmem>>, %arg11: memref<8x1xf32, #tpu.memory_space<vmem>>) attributes {dimension_semantics = [#tpu.dimension_semantics<parallel>, #tpu.dimension_semantics<arbitrary>], iteration_bounds = array<i64: 1, 1>, scalar_prefetch = 0 : i64, scratch_operands = 3 : i64, tpu.core_type = #tpu.core_type<tc>, window_params = [{transform_indices = @transform_0, window_bounds = array<i64: 1, 128>}, {transform_indices = @transform_1, window_bounds = array<i64: 128, 1>}, {transform_indices = @transform_2, window_bounds = array<i64: 128, 1>}, {pipeline_mode = #tpu.pipeline_mode<synchronous>, transform_indices = @transform_3, window_bounds = array<i64: 8, 16>}, {pipeline_mode = #tpu.pipeline_mode<synchronous>, transform_indices = @transform_4, window_bounds = array<i64: 32, 128>}, {pipeline_mode = #tpu.pipeline_mode<synchronous>, transform_indices = @transform_5, window_bounds = array<i64: 1, 128>}, {transform_indices = @transform_6, window_bounds = array<i64: 8, 128>}]} {
    %c0_i32 = arith.constant 0 : i32
    %0 = arith.cmpi eq, %arg1, %c0_i32 : i32
    %1 = arith.extui %0 : i1 to i32
    %c0_i32_0 = arith.constant 0 : i32
    %2 = arith.cmpi ne, %1, %c0_i32_0 : i32
    scf.if %2 {
      %cst_21 = arith.constant 0.000000e+00 : f32
      %38 = vector.broadcast %cst_21 : f32 to vector<8x128xf32>
      %c0_22 = arith.constant 0 : index
      %c0_23 = arith.constant 0 : index
      %39 = vector.load %arg10[%c0_22, %c0_23] : memref<8x128xf32, #tpu.memory_space<vmem>>, vector<8x128xf32>
      tpu.vector_store %arg10[%c0_22, %c0_23], %38 {strides = array<i32>} : memref<8x128xf32, #tpu.memory_space<vmem>>, vector<8x128xf32>,
      %cst_24 = arith.constant 0.000000e+00 : f32
      %40 = vector.broadcast %cst_24 : f32 to vector<8x1xf32>
      %c0_25 = arith.constant 0 : index
      %c0_26 = arith.constant 0 : index
      %41 = vector.load %arg11[%c0_25, %c0_26] : memref<8x1xf32, #tpu.memory_space<vmem>>, vector<8x1xf32>
      tpu.vector_store %arg11[%c0_25, %c0_26], %40 {strides = array<i32>} : memref<8x1xf32, #tpu.memory_space<vmem>>, vector<8x1xf32>,
      %c0_27 = arith.constant 0 : index
      %c0_28 = arith.constant 0 : index
      %42 = vector.load %arg5[%c0_27, %c0_28] : memref<8x16xf32, #tpu.memory_space<vmem>>, vector<8x16xf32>
      %c0_29 = arith.constant 0 : index
      %c0_30 = arith.constant 0 : index
      %43 = vector.load %arg6[%c0_29, %c0_30] : memref<32x128xf32, #tpu.memory_space<vmem>>, vector<16x128xf32>
      %cst_31 = arith.constant dense<0.000000e+00> : vector<8x128xf32>
      %44 = tpu.matmul %42, %43, %cst_31 {dimension_numbers = #tpu.dot_dimension_numbers<[1], [0], [0], [1], [0, 0, 1, 1], [], []>} : vector<8x16xf32>, vector<16x128xf32>, vector<8x128xf32> -> vector<8x128xf32>
      %c0_32 = arith.constant 0 : index
      %c0_33 = arith.constant 0 : index
      %45 = vector.load %arg9[%c0_32, %c0_33] : memref<16x128xf32, #tpu.memory_space<vmem>>, vector<8x128xf32>
      tpu.vector_store %arg9[%c0_32, %c0_33], %44 {strides = array<i32>} : memref<16x128xf32, #tpu.memory_space<vmem>>, vector<8x128xf32>,
      %c0_34 = arith.constant 0 : index
      %c0_35 = arith.constant 0 : index
      %46 = vector.load %arg5[%c0_34, %c0_35] : memref<8x16xf32, #tpu.memory_space<vmem>>, vector<8x16xf32>
      %c16 = arith.constant 16 : index
      %c0_36 = arith.constant 0 : index
      %47 = vector.load %arg6[%c16, %c0_36] : memref<32x128xf32, #tpu.memory_space<vmem>>, vector<16x128xf32>
      %cst_37 = arith.constant dense<0.000000e+00> : vector<8x128xf32>
      %48 = tpu.matmul %46, %47, %cst_37 {dimension_numbers = #tpu.dot_dimension_numbers<[1], [0], [0], [1], [0, 0, 1, 1], [], []>} : vector<8x16xf32>, vector<16x128xf32>, vector<8x128xf32> -> vector<8x128xf32>
      %c8 = arith.constant 8 : index
      %c0_38 = arith.constant 0 : index
      %49 = vector.load %arg9[%c8, %c0_38] : memref<16x128xf32, #tpu.memory_space<vmem>>, vector<8x128xf32>
      tpu.vector_store %arg9[%c8, %c0_38], %48 {strides = array<i32>} : memref<16x128xf32, #tpu.memory_space<vmem>>, vector<8x128xf32>,
    } else {
    }
    %c0 = arith.constant 0 : index
    %c0_1 = arith.constant 0 : index
    %3 = vector.load %arg3[%c0, %c0_1] : memref<128x1xi32, #tpu.memory_space<vmem>>, vector<128x1xi32>
    %c0_2 = arith.constant 0 : index
    %c0_3 = arith.constant 0 : index
    %4 = vector.load %arg4[%c0_2, %c0_3] : memref<128x1xi32, #tpu.memory_space<vmem>>, vector<128x1xi32>
    %c0_4 = arith.constant 0 : index
    %c0_5 = arith.constant 0 : index
    %5 = vector.load %arg2[%c0_4, %c0_5] : memref<1x128xi32, #tpu.memory_space<vmem>>, vector<1x128xi32>
    %6 = tpu.iota {dimensions = array<i32: 1>} : vector<128x16xi32>
    %7 = vector.broadcast %3 : vector<128x1xi32> to vector<128x16xi32>
    %8 = arith.cmpi eq, %6, %7 : vector<128x16xi32>
    %c8_i32 = arith.constant 8 : i32
    %9 = vector.broadcast %c8_i32 : i32 to vector<128x1xi32>
    %10 = arith.addi %4, %9 : vector<128x1xi32>
    %11 = vector.broadcast %10 : vector<128x1xi32> to vector<128x16xi32>
    %12 = arith.cmpi eq, %6, %11 : vector<128x16xi32>
    %13 = arith.ori %8, %12 : vector<128x16xi1>
    %14 = arith.extui %13 : vector<128x16xi1> to vector<128x16xi32>
    %15 = arith.sitofp %14 : vector<128x16xi32> to vector<128x16xf32>
    %c0_6 = arith.constant 0 : index
    %c0_7 = arith.constant 0 : index
    %16 = vector.load %arg9[%c0_6, %c0_7] : memref<16x128xf32, #tpu.memory_space<vmem>>, vector<16x128xf32>
    %cst = arith.constant dense<0.000000e+00> : vector<128x128xf32>
    %17 = tpu.matmul %15, %16, %cst {dimension_numbers = #tpu.dot_dimension_numbers<[1], [0], [0], [1], [0, 0, 1, 1], [], []>} : vector<128x16xf32>, vector<16x128xf32>, vector<128x128xf32> -> vector<128x128xf32>
    %18 = tpu.iota {dimensions = array<i32: 0>} : vector<8x128xi32>
    %c8_i32_8 = arith.constant 8 : i32
    %19 = arith.muli %arg0, %c8_i32_8 : i32
    %20 = vector.broadcast %19 : i32 to vector<8x128xi32>
    %21 = arith.addi %18, %20 : vector<8x128xi32>
    %22 = vector.broadcast %5 : vector<1x128xi32> to vector<8x128xi32>
    %23 = arith.cmpi eq, %21, %22 : vector<8x128xi32>
    %24 = arith.extui %23 : vector<8x128xi1> to vector<8x128xi32>
    %25 = arith.sitofp %24 : vector<8x128xi32> to vector<8x128xf32>
    %c0_9 = arith.constant 0 : index
    %c0_10 = arith.constant 0 : index
    %26 = vector.load %arg10[%c0_9, %c0_10] : memref<8x128xf32, #tpu.memory_space<vmem>>, vector<8x128xf32>
    %cst_11 = arith.constant dense<0.000000e+00> : vector<8x128xf32>
    %27 = tpu.matmul %25, %17, %cst_11 {dimension_numbers = #tpu.dot_dimension_numbers<[1], [0], [0], [1], [0, 0, 1, 1], [], []>} : vector<8x128xf32>, vector<128x128xf32>, vector<8x128xf32> -> vector<8x128xf32>
    %28 = arith.addf %26, %27 : vector<8x128xf32>
    %c0_12 = arith.constant 0 : index
    %c0_13 = arith.constant 0 : index
    %29 = vector.load %arg10[%c0_12, %c0_13] : memref<8x128xf32, #tpu.memory_space<vmem>>, vector<8x128xf32>
    tpu.vector_store %arg10[%c0_12, %c0_13], %28 {strides = array<i32>} : memref<8x128xf32, #tpu.memory_space<vmem>>, vector<8x128xf32>,
    %c0_14 = arith.constant 0 : index
    %c0_15 = arith.constant 0 : index
    %30 = vector.load %arg11[%c0_14, %c0_15] : memref<8x1xf32, #tpu.memory_space<vmem>>, vector<8x1xf32>
    %cst_16 = arith.constant dense<0.000000e+00> : vector<8xf32>
    %31 = vector.multi_reduction <add>, %25, %cst_16 [1] : vector<8x128xf32> to vector<8xf32>
    %32 = vector.shape_cast %31 : vector<8xf32> to vector<8x1xf32>
    %33 = arith.addf %30, %32 : vector<8x1xf32>
    %c0_17 = arith.constant 0 : index
    %c0_18 = arith.constant 0 : index
    %34 = vector.load %arg11[%c0_17, %c0_18] : memref<8x1xf32, #tpu.memory_space<vmem>>, vector<8x1xf32>
    tpu.vector_store %arg11[%c0_17, %c0_18], %33 {strides = array<i32>} : memref<8x1xf32, #tpu.memory_space<vmem>>, vector<8x1xf32>,
    %c0_i32_19 = arith.constant 0 : i32
    %35 = arith.cmpi eq, %arg1, %c0_i32_19 : i32
    %36 = arith.extui %35 : i1 to i32
    %c0_i32_20 = arith.constant 0 : i32
    %37 = arith.cmpi ne, %36, %c0_i32_20 : i32
    scf.if %37 {
      %c0_21 = arith.constant 0 : index
      %c0_22 = arith.constant 0 : index
      %38 = vector.load %arg10[%c0_21, %c0_22] : memref<8x128xf32, #tpu.memory_space<vmem>>, vector<8x128xf32>
      %c0_23 = arith.constant 0 : index
      %c0_24 = arith.constant 0 : index
      %39 = vector.load %arg11[%c0_23, %c0_24] : memref<8x1xf32, #tpu.memory_space<vmem>>, vector<8x1xf32>
      %c0_25 = arith.constant 0 : index
      %c0_26 = arith.constant 0 : index
      %40 = vector.load %arg7[%c0_25, %c0_26] : memref<1x128xf32, #tpu.memory_space<vmem>>, vector<1x128xf32>
      %41 = vector.broadcast %39 : vector<8x1xf32> to vector<8x128xf32>
      %42 = vector.broadcast %40 : vector<1x128xf32> to vector<8x128xf32>
      %43 = arith.mulf %41, %42 : vector<8x128xf32>
      %44 = arith.addf %38, %43 : vector<8x128xf32>
      %c0_27 = arith.constant 0 : index
      %c0_28 = arith.constant 0 : index
      %45 = vector.load %arg8[%c0_27, %c0_28] : memref<8x128xf32, #tpu.memory_space<vmem>>, vector<8x128xf32>
      tpu.vector_store %arg8[%c0_27, %c0_28], %44 {strides = array<i32>} : memref<8x128xf32, #tpu.memory_space<vmem>>, vector<8x128xf32>,
    } else {
    }
    return
  }
  func.func @transform_0(%arg0: i32, %arg1: i32) -> (i32, i32) {
    %c0_i32 = arith.constant 0 : i32
    %c0_i32_0 = arith.constant 0 : i32
    return %c0_i32, %arg1 : i32, i32
  }
  func.func @transform_1(%arg0: i32, %arg1: i32) -> (i32, i32) {
    %c0_i32 = arith.constant 0 : i32
    %c0_i32_0 = arith.constant 0 : i32
    return %arg1, %c0_i32 : i32, i32
  }
  func.func @transform_2(%arg0: i32, %arg1: i32) -> (i32, i32) {
    %c0_i32 = arith.constant 0 : i32
    %c0_i32_0 = arith.constant 0 : i32
    return %arg1, %c0_i32 : i32, i32
  }
  func.func @transform_3(%arg0: i32, %arg1: i32) -> (i32, i32) {
    %c0_i32 = arith.constant 0 : i32
    %c0_i32_0 = arith.constant 0 : i32
    %c0_i32_1 = arith.constant 0 : i32
    return %c0_i32, %c0_i32_0 : i32, i32
  }
  func.func @transform_4(%arg0: i32, %arg1: i32) -> (i32, i32) {
    %c0_i32 = arith.constant 0 : i32
    %c0_i32_0 = arith.constant 0 : i32
    %c0_i32_1 = arith.constant 0 : i32
    return %c0_i32, %c0_i32_0 : i32, i32
  }
  func.func @transform_5(%arg0: i32, %arg1: i32) -> (i32, i32) {
    %c0_i32 = arith.constant 0 : i32
    %c0_i32_0 = arith.constant 0 : i32
    %c0_i32_1 = arith.constant 0 : i32
    return %c0_i32, %c0_i32_0 : i32, i32
  }
  func.func @transform_6(%arg0: i32, %arg1: i32) -> (i32, i32) {
    %c0_i32 = arith.constant 0 : i32
    %c0_i32_0 = arith.constant 0 : i32
    return %arg0, %c0_i32 : i32, i32
  }
}

</mosaic_0001>

<llo_original>
// kernel: gnn_forward.1
$region0: #{gnn_forward.1}
  #allocation0 [shape = 'u32[]', space=smem, size = 0x4, offset = 0x4, fixed_abs, tag = 'smem constant byte address 0x4 - core index']
  #allocation1 [shape = 'u32[144,128]{1,0:T(1,128)}', space=vmem, size = 0x12000, scoped, tag = 'internal scratch']
  #allocation2 [shape = 'f32[16,128]{1,0:T(8,128)}', space=vmem, size = 0x2000, scoped, tag = 'scratch operand']
  #allocation3 [shape = 'f32[8,128]{1,0:T(8,128)}', space=vmem, size = 0x1000, scoped, tag = 'scratch operand']
  #allocation4 [shape = 'f32[8,1]{1,0:T(8,128)}', space=vmem, size = 0x1000, scoped, tag = 'scratch operand']
  %s0 = inlined_call_operand.vmem [shape: s32[1,128], index: 0, kind: input, shape index: {}]
  %s1 = inlined_call_operand.vmem [shape: s32[128,1], index: 1, kind: input, shape index: {}]
  %s2 = inlined_call_operand.vmem [shape: s32[128,1], index: 2, kind: input, shape index: {}]
  %s3 = inlined_call_operand.vmem [shape: f32[8,16], index: 3, kind: input, shape index: {}]
  %s4 = inlined_call_operand.vmem [shape: f32[32,128], index: 4, kind: input, shape index: {}]
  %s5 = inlined_call_operand.vmem [shape: f32[1,128], index: 5, kind: input, shape index: {}]
  %s6 = inlined_call_operand.hbm [shape: f32[8,128], index: 6, kind: output, shape index: {}]
  %s7 = sld [smem:[#allocation0]]
  $region42: #{gnn_forward.1} parent=0
    _
  %s9 = ssub.s32 1, %s7
  %s10 = scalar_select 0, %s9, %s7
  $region1: #{gnn_forward.1} parent=0
    #allocation5 [shape = 'u8[4096]{0}', space=vmem, size = 0x1000, scoped, tag = 'output window, operand 0, single buffered']
    #allocation6 [shape = 's32[1]{0}', space=sflag, size = 0x4, scoped, tag = 'scoped memory for gnn_forward.1']
    %11 = vsyncpa [#allocation6], 0
    // Predicated region
    $region2: #{gnn_forward.1} parent=1 // pred_check
      _
    $region3: #{gnn_forward.1} parent=1 // pred_check_branch
      %13 = sbr.rel (0) target = $region5
    $region4: #{gnn_forward.1} parent=1 // pred_region
      _
    $region5: #{gnn_forward.1} parent=1 // pred_fallthru
      _
    // Predicated region
    $region6: #{gnn_forward.1} parent=1 // pred_check
      _
    $region7: #{gnn_forward.1} parent=1 // pred_check_branch
      %15 = sbr.rel (0) target = $region9
    $region8: #{gnn_forward.1} parent=1 // pred_region
      _
    $region9: #{gnn_forward.1} parent=1 // pred_fallthru
      _
    // Predicated region
    $region10: #{gnn_forward.1} parent=1 // pred_check
      _
    $region11: #{gnn_forward.1} parent=1 // pred_check_branch
      %17 = sbr.rel (0) target = $region13
    $region12: #{gnn_forward.1} parent=1 // pred_region
      _
    $region13: #{gnn_forward.1} parent=1 // pred_fallthru
      _
    // Predicated region
    $region14: #{gnn_forward.1} parent=1 // pred_check
      _
    $region15: #{gnn_forward.1} parent=1 // pred_check_branch
      %19 = sbr.rel (0) target = $region17
    $region16: #{gnn_forward.1} parent=1 // pred_region
      _
    $region17: #{gnn_forward.1} parent=1 // pred_fallthru
      _
    // Predicated region
    $region18: #{gnn_forward.1} parent=1 // pred_check
      _
    $region19: #{gnn_forward.1} parent=1 // pred_check_branch
      %21 = sbr.rel (0) target = $region21
    $region20: #{gnn_forward.1} parent=1 // pred_region
      _
    $region21: #{gnn_forward.1} parent=1 // pred_fallthru
      _
    // Predicated region
    $region22: #{gnn_forward.1} parent=1 // pred_check
      _
    $region23: #{gnn_forward.1} parent=1 // pred_check_branch
      %23 = sbr.rel (0) target = $region25
    $region24: #{gnn_forward.1} parent=1 // pred_region
      _
    $region25: #{gnn_forward.1} parent=1 // pred_fallthru
      _
    %p24 = scmp.eq.s32.totalorder 0, 0
    // Predicated region
    $region26: #{gnn_forward.1} parent=1 // pred_check
      %p25 = pneg %p24
    $region27: #{gnn_forward.1} parent=1 // pred_check_branch
      %27 = sbr.rel (%p25) target = $region29
    $region28: #{gnn_forward.1} parent=1 // pred_region
      %28 = vst [vmem:[#allocation3] sm:$0xff] 0.0
      %vm29 = vcmask 7168
      %30 = vst.msk [vmem:[#allocation4] sm:$0xff] %vm29, 0.0
      %v31 = vld [vmem:[%s3] sm:$0xff]
      %v32 = vld [vmem:[%s4] sm:$0xff]
      %v33 = vld [vmem:[%s4 + $0x8] sm:$0xff]
      %vm34 = vcmask 130048
      %v36 = vsel %vm34, %v31, 0
      %38 = vmatprep.subr.mxu0 0.0
      %39 = vmatpush1.msra.mxu0 %v32
      %40 = vmatprep.subr.mxu0 0.0
      %41 = vmatpush1.msra.mxu0 %v33
      %42 = vmatprep.subr.mxu0 0.0
      %43 = vmatpush1.msra.mxu0 0.0
      %44 = vmatprep.subr.mxu0 0.0
      %45 = vmatpush1.msra.mxu0 0.0
      %46 = vmatprep.subr.mxu0 0.0
      %47 = vmatpush1.msra.mxu0 0.0
      %48 = vmatprep.subr.mxu0 0.0
      %49 = vmatpush1.msra.mxu0 0.0
      %50 = vmatprep.subr.mxu0 0.0
      %51 = vmatpush1.msra.mxu0 0.0
      %52 = vmatprep.subr.mxu0 0.0
      %53 = vmatpush1.msra.mxu0 0.0
      %54 = vmatprep.subr.mxu0 0.0
      %55 = vmatpush1.msra.mxu0 0.0
      %56 = vmatprep.subr.mxu0 0.0
      %57 = vmatpush1.msra.mxu0 0.0
      %58 = vmatprep.subr.mxu0 0.0
      %59 = vmatpush1.msra.mxu0 0.0
      %60 = vmatprep.subr.mxu0 0.0
      %61 = vmatpush1.msra.mxu0 0.0
      %62 = vmatprep.subr.mxu0 0.0
      %63 = vmatpush1.msra.mxu0 0.0
      %64 = vmatprep.subr.mxu0 0.0
      %65 = vmatpush1.msra.mxu0 0.0
      %66 = vmatprep.subr.mxu0 0.0
      %67 = vmatpush1.msra.mxu0 0.0
      %68 = vmatprep.subr.mxu0 0.0
      %69 = vmatpush1.msra.mxu0 0.0
      %70 = vmatprep.subr.mxu0 0.0
      %71 = vmatpush1.msra.mxu0 0.0
      %72 = vmatprep.subr.mxu0 0.0
      %73 = vmatpush1.msra.mxu0 0.0
      %74 = vmatprep.subr.mxu0 0.0
      %75 = vmatpush1.msra.mxu0 0.0
      %76 = vmatprep.subr.mxu0 0.0
      %77 = vmatpush1.msra.mxu0 0.0
      %78 = vmatprep.subr.mxu0 0.0
      %79 = vmatpush1.msra.mxu0 0.0
      %80 = vmatprep.subr.mxu0 0.0
      %81 = vmatpush1.msra.mxu0 0.0
      %82 = vmatprep.subr.mxu0 0.0
      %83 = vmatpush1.msra.mxu0 0.0
      %84 = vmatprep.subr.mxu0 0.0
      %85 = vmatpush1.msra.mxu0 0.0
      %86 = vmatprep.subr.mxu0 0.0
      %87 = vmatpush1.msra.mxu0 0.0
      %88 = vmatprep.subr.mxu0 0.0
      %89 = vmatpush1.msra.mxu0 0.0
      %90 = vmatprep.subr.mxu0 0.0
      %91 = vmatpush1.msra.mxu0 0.0
      %92 = vmatprep.subr.mxu0 0.0
      %93 = vmatpush1.msra.mxu0 0.0
      %94 = vmatprep.subr.mxu0 0.0
      %95 = vmatpush1.msra.mxu0 0.0
      %96 = vmatprep.subr.mxu0 0.0
      %97 = vmatpush1.msra.mxu0 0.0
      %98 = vmatprep.subr.mxu0 0.0
      %99 = vmatpush1.msra.mxu0 0.0
      %100 = vmatprep.subr.mxu0 0.0
      %101 = vmatpush1.msra.mxu0 0.0
      %102 = vmatprep.mubr.f32.mxu0 0.0
      %103 = vmatmul.mubr.f32.gmra.mrb[0].mxu0 %v36
      %v104 = vpop.f32.mrb[0].mxu0
      %v105 = vadd.f32 0.0, %v104
      %v106 = vpop.f32.mrb[0].mxu0
      %107 = vdwg.mxu0
      %108 = vst [vmem:[#allocation2] sm:$0xff] %v105
      %v109 = vld [vmem:[%s3] sm:$0xff]
      %v110 = vld [vmem:[%s4 + $0x10] sm:$0xff]
      %v111 = vld [vmem:[%s4 + $0x18] sm:$0xff]
      %v113 = vsel %vm34, %v109, 0
      %115 = vmatprep.subr.mxu0 0.0
      %116 = vmatpush1.msra.mxu0 %v110
      %117 = vmatprep.subr.mxu0 0.0
      %118 = vmatpush1.msra.mxu0 %v111
      %119 = vmatprep.subr.mxu0 0.0
      %120 = vmatpush1.msra.mxu0 0.0
      %121 = vmatprep.subr.mxu0 0.0
      %122 = vmatpush1.msra.mxu0 0.0
      %123 = vmatprep.subr.mxu0 0.0
      %124 = vmatpush1.msra.mxu0 0.0
      %125 = vmatprep.subr.mxu0 0.0
      %126 = vmatpush1.msra.mxu0 0.0
      %127 = vmatprep.subr.mxu0 0.0
      %128 = vmatpush1.msra.mxu0 0.0
      %129 = vmatprep.subr.mxu0 0.0
      %130 = vmatpush1.msra.mxu0 0.0
      %131 = vmatprep.subr.mxu0 0.0
      %132 = vmatpush1.msra.mxu0 0.0
      %133 = vmatprep.subr.mxu0 0.0
      %134 = vmatpush1.msra.mxu0 0.0
      %135 = vmatprep.subr.mxu0 0.0
      %136 = vmatpush1.msra.mxu0 0.0
      %137 = vmatprep.subr.mxu0 0.0
      %138 = vmatpush1.msra.mxu0 0.0
      %139 = vmatprep.subr.mxu0 0.0
      %140 = vmatpush1.msra.mxu0 0.0
      %141 = vmatprep.subr.mxu0 0.0
      %142 = vmatpush1.msra.mxu0 0.0
      %143 = vmatprep.subr.mxu0 0.0
      %144 = vmatpush1.msra.mxu0 0.0
      %145 = vmatprep.subr.mxu0 0.0
      %146 = vmatpush1.msra.mxu0 0.0
      %147 = vmatprep.subr.mxu0 0.0
      %148 = vmatpush1.msra.mxu0 0.0
      %149 = vmatprep.subr.mxu0 0.0
      %150 = vmatpush1.msra.mxu0 0.0
      %151 = vmatprep.subr.mxu0 0.0
      %152 = vmatpush1.msra.mxu0 0.0
      %153 = vmatprep.subr.mxu0 0.0
      %154 = vmatpush1.msra.mxu0 0.0
      %155 = vmatprep.subr.mxu0 0.0
      %156 = vmatpush1.msra.mxu0 0.0
      %157 = vmatprep.subr.mxu0 0.0
      %158 = vmatpush1.msra.mxu0 0.0
      %159 = vmatprep.subr.mxu0 0.0
      %160 = vmatpush1.msra.mxu0 0.0
      %161 = vmatprep.subr.mxu0 0.0
      %162 = vmatpush1.msra.mxu0 0.0
      %163 = vmatprep.subr.mxu0 0.0
      %164 = vmatpush1.msra.mxu0 0.0
      %165 = vmatprep.subr.mxu0 0.0
      %166 = vmatpush1.msra.mxu0 0.0
      %167 = vmatprep.subr.mxu0 0.0
      %168 = vmatpush1.msra.mxu0 0.0
      %169 = vmatprep.subr.mxu0 0.0
      %170 = vmatpush1.msra.mxu0 0.0
      %171 = vmatprep.subr.mxu0 0.0
      %172 = vmatpush1.msra.mxu0 0.0
      %173 = vmatprep.subr.mxu0 0.0
      %174 = vmatpush1.msra.mxu0 0.0
      %175 = vmatprep.subr.mxu0 0.0
      %176 = vmatpush1.msra.mxu0 0.0
      %177 = vmatprep.subr.mxu0 0.0
      %178 = vmatpush1.msra.mxu0 0.0
      %179 = vmatprep.mubr.f32.mxu0 0.0
      %180 = vmatmul.mubr.f32.gmra.mrb[0].mxu0 %v113
      %v181 = vpop.f32.mrb[0].mxu0
      %v182 = vadd.f32 0.0, %v181
      %v183 = vpop.f32.mrb[0].mxu0
      %184 = vdwg.mxu0
      %185 = vst [vmem:[#allocation2 + $0x8] sm:$0xff] %v182
    $region29: #{gnn_forward.1} parent=1 // pred_fallthru
      _
    %v186 = vld [vmem:[%s1] sm:$0xff]
    %v187 = vld [vmem:[%s1 + $0x8] sm:$0xff]
    %v188 = vld [vmem:[%s1 + $0x10] sm:$0xff]
    %v189 = vld [vmem:[%s1 + $0x18] sm:$0xff]
    %v190 = vld [vmem:[%s1 + $0x20] sm:$0xff]
    %v191 = vld [vmem:[%s1 + $0x28] sm:$0xff]
    %v192 = vld [vmem:[%s1 + $0x30] sm:$0xff]
    %v193 = vld [vmem:[%s1 + $0x38] sm:$0xff]
    %v194 = vld [vmem:[%s1 + $0x40] sm:$0xff]
    %v195 = vld [vmem:[%s1 + $0x48] sm:$0xff]
    %v196 = vld [vmem:[%s1 + $0x50] sm:$0xff]
    %v197 = vld [vmem:[%s1 + $0x58] sm:$0xff]
    %v198 = vld [vmem:[%s1 + $0x60] sm:$0xff]
    %v199 = vld [vmem:[%s1 + $0x68] sm:$0xff]
    %v200 = vld [vmem:[%s1 + $0x70] sm:$0xff]
    %v201 = vld [vmem:[%s1 + $0x78] sm:$0xff]
    %v202 = vld [vmem:[%s2] sm:$0xff]
    %v203 = vld [vmem:[%s2 + $0x8] sm:$0xff]
    %v204 = vld [vmem:[%s2 + $0x10] sm:$0xff]
    %v205 = vld [vmem:[%s2 + $0x18] sm:$0xff]
    %v206 = vld [vmem:[%s2 + $0x20] sm:$0xff]
    %v207 = vld [vmem:[%s2 + $0x28] sm:$0xff]
    %v208 = vld [vmem:[%s2 + $0x30] sm:$0xff]
    %v209 = vld [vmem:[%s2 + $0x38] sm:$0xff]
    %v210 = vld [vmem:[%s2 + $0x40] sm:$0xff]
    %v211 = vld [vmem:[%s2 + $0x48] sm:$0xff]
    %v212 = vld [vmem:[%s2 + $0x50] sm:$0xff]
    %v213 = vld [vmem:[%s2 + $0x58] sm:$0xff]
    %v214 = vld [vmem:[%s2 + $0x60] sm:$0xff]
    %v215 = vld [vmem:[%s2 + $0x68] sm:$0xff]
    %v216 = vld [vmem:[%s2 + $0x70] sm:$0xff]
    %v217 = vld [vmem:[%s2 + $0x78] sm:$0xff]
    %v218 = vld [vmem:[%s0] sm:$0x1]
    %v219 = vlaneseq
    %v220 = vand.u32 %v219, 127
    %221 = vset.pattern.permute.xlu0 0
    %222 = vperm.xlu0 %221, %v186
    %v223 = vpop.permute.xlu0 %222
    %224 = vset.pattern.permute.xlu0 0
    %225 = vperm.xlu0 %224, %v187
    %v226 = vpop.permute.xlu0 %225
    %227 = vset.pattern.permute.xlu0 0
    %228 = vperm.xlu0 %227, %v188
    %v229 = vpop.permute.xlu0 %228
    %230 = vset.pattern.permute.xlu0 0
    %231 = vperm.xlu0 %230, %v189
    %v232 = vpop.permute.xlu0 %231
    %233 = vset.pattern.permute.xlu0 0
    %234 = vperm.xlu0 %233, %v190
    %v235 = vpop.permute.xlu0 %234
    %236 = vset.pattern.permute.xlu0 0
    %237 = vperm.xlu0 %236, %v191
    %v238 = vpop.permute.xlu0 %237
    %239 = vset.pattern.permute.xlu0 0
    %240 = vperm.xlu0 %239, %v192
    %v241 = vpop.permute.xlu0 %240
    %242 = vset.pattern.permute.xlu0 0
    %243 = vperm.xlu0 %242, %v193
    %v244 = vpop.permute.xlu0 %243
    %245 = vset.pattern.permute.xlu0 0
    %246 = vperm.xlu0 %245, %v194
    %v247 = vpop.permute.xlu0 %246
    %248 = vset.pattern.permute.xlu0 0
    %249 = vperm.xlu0 %248, %v195
    %v250 = vpop.permute.xlu0 %249
    %251 = vset.pattern.permute.xlu0 0
    %252 = vperm.xlu0 %251, %v196
    %v253 = vpop.permute.xlu0 %252
    %254 = vset.pattern.permute.xlu0 0
    %255 = vperm.xlu0 %254, %v197
    %v256 = vpop.permute.xlu0 %255
    %257 = vset.pattern.permute.xlu0 0
    %258 = vperm.xlu0 %257, %v198
    %v259 = vpop.permute.xlu0 %258
    %260 = vset.pattern.permute.xlu0 0
    %261 = vperm.xlu0 %260, %v199
    %v262 = vpop.permute.xlu0 %261
    %263 = vset.pattern.permute.xlu0 0
    %264 = vperm.xlu0 %263, %v200
    %v265 = vpop.permute.xlu0 %264
    %266 = vset.pattern.permute.xlu0 0
    %267 = vperm.xlu0 %266, %v201
    %v268 = vpop.permute.xlu0 %267
    %vm269 = vcmp.eq.s32.totalorder %v220, %v223
    %vm270 = vcmp.eq.s32.totalorder %v220, %v226
    %vm271 = vcmp.eq.s32.totalorder %v220, %v229
    %vm272 = vcmp.eq.s32.totalorder %v220, %v232
    %vm273 = vcmp.eq.s32.totalorder %v220, %v235
    %vm274 = vcmp.eq.s32.totalorder %v220, %v238
    %vm275 = vcmp.eq.s32.totalorder %v220, %v241
    %vm276 = vcmp.eq.s32.totalorder %v220, %v244
    %vm277 = vcmp.eq.s32.totalorder %v220, %v247
    %vm278 = vcmp.eq.s32.totalorder %v220, %v250
    %vm279 = vcmp.eq.s32.totalorder %v220, %v253
    %vm280 = vcmp.eq.s32.totalorder %v220, %v256
    %vm281 = vcmp.eq.s32.totalorder %v220, %v259
    %vm282 = vcmp.eq.s32.totalorder %v220, %v262
    %vm283 = vcmp.eq.s32.totalorder %v220, %v265
    %vm284 = vcmp.eq.s32.totalorder %v220, %v268
    %v285 = vadd.s32 %v202, 8
    %v286 = vadd.s32 %v203, 8
    %v287 = vadd.s32 %v204, 8
    %v288 = vadd.s32 %v205, 8
    %v289 = vadd.s32 %v206, 8
    %v290 = vadd.s32 %v207, 8
    %v291 = vadd.s32 %v208, 8
    %v292 = vadd.s32 %v209, 8
    %v293 = vadd.s32 %v210, 8
    %v294 = vadd.s32 %v211, 8
    %v295 = vadd.s32 %v212, 8
    %v296 = vadd.s32 %v213, 8
    %v297 = vadd.s32 %v214, 8
    %v298 = vadd.s32 %v215, 8
    %v299 = vadd.s32 %v216, 8
    %v300 = vadd.s32 %v217, 8
    %301 = vset.pattern.permute.xlu0 0
    %302 = vperm.xlu0 %301, %v285
    %v303 = vpop.permute.xlu0 %302
    %304 = vset.pattern.permute.xlu0 0
    %305 = vperm.xlu0 %304, %v286
    %v306 = vpop.permute.xlu0 %305
    %307 = vset.pattern.permute.xlu0 0
    %308 = vperm.xlu0 %307, %v287
    %v309 = vpop.permute.xlu0 %308
    %310 = vset.pattern.permute.xlu0 0
    %311 = vperm.xlu0 %310, %v288
    %v312 = vpop.permute.xlu0 %311
    %313 = vset.pattern.permute.xlu0 0
    %314 = vperm.xlu0 %313, %v289
    %v315 = vpop.permute.xlu0 %314
    %316 = vset.pattern.permute.xlu0 0
    %317 = vperm.xlu0 %316, %v290
    %v318 = vpop.permute.xlu0 %317
    %319 = vset.pattern.permute.xlu0 0
    %320 = vperm.xlu0 %319, %v291
    %v321 = vpop.permute.xlu0 %320
    %322 = vset.pattern.permute.xlu0 0
    %323 = vperm.xlu0 %322, %v292
    %v324 = vpop.permute.xlu0 %323
    %325 = vset.pattern.permute.xlu0 0
    %326 = vperm.xlu0 %325, %v293
    %v327 = vpop.permute.xlu0 %326
    %328 = vset.pattern.permute.xlu0 0
    %329 = vperm.xlu0 %328, %v294
    %v330 = vpop.permute.xlu0 %329
    %331 = vset.pattern.permute.xlu0 0
    %332 = vperm.xlu0 %331, %v295
    %v333 = vpop.permute.xlu0 %332
    %334 = vset.pattern.permute.xlu0 0
    %335 = vperm.xlu0 %334, %v296
    %v336 = vpop.permute.xlu0 %335
    %337 = vset.pattern.permute.xlu0 0
    %338 = vperm.xlu0 %337, %v297
    %v339 = vpop.permute.xlu0 %338
    %340 = vset.pattern.permute.xlu0 0
    %341 = vperm.xlu0 %340, %v298
    %v342 = vpop.permute.xlu0 %341
    %343 = vset.pattern.permute.xlu0 0
    %344 = vperm.xlu0 %343, %v299
    %v345 = vpop.permute.xlu0 %344
    %346 = vset.pattern.permute.xlu0 0
    %347 = vperm.xlu0 %346, %v300
    %v348 = vpop.permute.xlu0 %347
    %vm349 = vcmp.eq.s32.totalorder %v220, %v303
    %vm350 = vcmp.eq.s32.totalorder %v220, %v306
    %vm351 = vcmp.eq.s32.totalorder %v220, %v309
    %vm352 = vcmp.eq.s32.totalorder %v220, %v312
    %vm353 = vcmp.eq.s32.totalorder %v220, %v315
    %vm354 = vcmp.eq.s32.totalorder %v220, %v318
    %vm355 = vcmp.eq.s32.totalorder %v220, %v321
    %vm356 = vcmp.eq.s32.totalorder %v220, %v324
    %vm357 = vcmp.eq.s32.totalorder %v220, %v327
    %vm358 = vcmp.eq.s32.totalorder %v220, %v330
    %vm359 = vcmp.eq.s32.totalorder %v220, %v333
    %vm360 = vcmp.eq.s32.totalorder %v220, %v336
    %vm361 = vcmp.eq.s32.totalorder %v220, %v339
    %vm362 = vcmp.eq.s32.totalorder %v220, %v342
    %vm363 = vcmp.eq.s32.totalorder %v220, %v345
    %vm364 = vcmp.eq.s32.totalorder %v220, %v348
    %vm365 = vmor %vm269, %vm349
    %vm366 = vmor %vm270, %vm350
    %vm367 = vmor %vm271, %vm351
    %vm368 = vmor %vm272, %vm352
    %vm369 = vmor %vm273, %vm353
    %vm370 = vmor %vm274, %vm354
    %vm371 = vmor %vm275, %vm355
    %vm372 = vmor %vm276, %vm356
    %vm373 = vmor %vm277, %vm357
    %vm374 = vmor %vm278, %vm358
    %vm375 = vmor %vm279, %vm359
    %vm376 = vmor %vm280, %vm360
    %vm377 = vmor %vm281, %vm361
    %vm378 = vmor %vm282, %vm362
    %vm379 = vmor %vm283, %vm363
    %vm380 = vmor %vm284, %vm364
    %v381 = vsel %vm365, 1, 0
    %v382 = vsel %vm366, 1, 0
    %v383 = vsel %vm367, 1, 0
    %v384 = vsel %vm368, 1, 0
    %v385 = vsel %vm369, 1, 0
    %v386 = vsel %vm370, 1, 0
    %v387 = vsel %vm371, 1, 0
    %v388 = vsel %vm372, 1, 0
    %v389 = vsel %vm373, 1, 0
    %v390 = vsel %vm374, 1, 0
    %v391 = vsel %vm375, 1, 0
    %v392 = vsel %vm376, 1, 0
    %v393 = vsel %vm377, 1, 0
    %v394 = vsel %vm378, 1, 0
    %v395 = vsel %vm379, 1, 0
    %v396 = vsel %vm380, 1, 0
    %v397 = vcvt.s32.f32 %v381
    %v398 = vcvt.s32.f32 %v382
    %v399 = vcvt.s32.f32 %v383
    %v400 = vcvt.s32.f32 %v384
    %v401 = vcvt.s32.f32 %v385
    %v402 = vcvt.s32.f32 %v386
    %v403 = vcvt.s32.f32 %v387
    %v404 = vcvt.s32.f32 %v388
    %v405 = vcvt.s32.f32 %v389
    %v406 = vcvt.s32.f32 %v390
    %v407 = vcvt.s32.f32 %v391
    %v408 = vcvt.s32.f32 %v392
    %v409 = vcvt.s32.f32 %v393
    %v410 = vcvt.s32.f32 %v394
    %v411 = vcvt.s32.f32 %v395
    %v412 = vcvt.s32.f32 %v396
    %v413 = vld [vmem:[#allocation2] sm:$0xff]
    %v414 = vld [vmem:[#allocation2 + $0x8] sm:$0xff]
    %vm415 = vcmask 130048
    %v417 = vsel %vm415, %v397, 0
    %v420 = vsel %vm415, %v398, 0
    %v423 = vsel %vm415, %v399, 0
    %v426 = vsel %vm415, %v400, 0
    %v429 = vsel %vm415, %v401, 0
    %v432 = vsel %vm415, %v402, 0
    %v435 = vsel %vm415, %v403, 0
    %v438 = vsel %vm415, %v404, 0
    %v441 = vsel %vm415, %v405, 0
    %v444 = vsel %vm415, %v406, 0
    %v447 = vsel %vm415, %v407, 0
    %v450 = vsel %vm415, %v408, 0
    %v453 = vsel %vm415, %v409, 0
    %v456 = vsel %vm415, %v410, 0
    %v459 = vsel %vm415, %v411, 0
    %v462 = vsel %vm415, %v412, 0
    %464 = vmatprep.subr.mxu0 0.0
    %465 = vmatpush1.msra.mxu0 %v413
    %466 = vmatprep.subr.mxu0 0.0
    %467 = vmatpush1.msra.mxu0 %v414
    %468 = vmatprep.subr.mxu0 0.0
    %469 = vmatpush1.msra.mxu0 0.0
    %470 = vmatprep.subr.mxu0 0.0
    %471 = vmatpush1.msra.mxu0 0.0
    %472 = vmatprep.subr.mxu0 0.0
    %473 = vmatpush1.msra.mxu0 0.0
    %474 = vmatprep.subr.mxu0 0.0
    %475 = vmatpush1.msra.mxu0 0.0
    %476 = vmatprep.subr.mxu0 0.0
    %477 = vmatpush1.msra.mxu0 0.0
    %478 = vmatprep.subr.mxu0 0.0
    %479 = vmatpush1.msra.mxu0 0.0
    %480 = vmatprep.subr.mxu0 0.0
    %481 = vmatpush1.msra.mxu0 0.0
    %482 = vmatprep.subr.mxu0 0.0
    %483 = vmatpush1.msra.mxu0 0.0
    %484 = vmatprep.subr.mxu0 0.0
    %485 = vmatpush1.msra.mxu0 0.0
    %486 = vmatprep.subr.mxu0 0.0
    %487 = vmatpush1.msra.mxu0 0.0
    %488 = vmatprep.subr.mxu0 0.0
    %489 = vmatpush1.msra.mxu0 0.0
    %490 = vmatprep.subr.mxu0 0.0
    %491 = vmatpush1.msra.mxu0 0.0
    %492 = vmatprep.subr.mxu0 0.0
    %493 = vmatpush1.msra.mxu0 0.0
    %494 = vmatprep.subr.mxu0 0.0
    %495 = vmatpush1.msra.mxu0 0.0
    %496 = vmatprep.subr.mxu0 0.0
    %497 = vmatpush1.msra.mxu0 0.0
    %498 = vmatprep.subr.mxu0 0.0
    %499 = vmatpush1.msra.mxu0 0.0
    %500 = vmatprep.subr.mxu0 0.0
    %501 = vmatpush1.msra.mxu0 0.0
    %502 = vmatprep.subr.mxu0 0.0
    %503 = vmatpush1.msra.mxu0 0.0
    %504 = vmatprep.subr.mxu0 0.0
    %505 = vmatpush1.msra.mxu0 0.0
    %506 = vmatprep.subr.mxu0 0.0
    %507 = vmatpush1.msra.mxu0 0.0
    %508 = vmatprep.subr.mxu0 0.0
    %509 = vmatpush1.msra.mxu0 0.0
    %510 = vmatprep.subr.mxu0 0.0
    %511 = vmatpush1.msra.mxu0 0.0
    %512 = vmatprep.subr.mxu0 0.0
    %513 = vmatpush1.msra.mxu0 0.0
    %514 = vmatprep.subr.mxu0 0.0
    %515 = vmatpush1.msra.mxu0 0.0
    %516 = vmatprep.subr.mxu0 0.0
    %517 = vmatpush1.msra.mxu0 0.0
    %518 = vmatprep.subr.mxu0 0.0
    %519 = vmatpush1.msra.mxu0 0.0
    %520 = vmatprep.subr.mxu0 0.0
    %521 = vmatpush1.msra.mxu0 0.0
    %522 = vmatprep.subr.mxu0 0.0
    %523 = vmatpush1.msra.mxu0 0.0
    %524 = vmatprep.subr.mxu0 0.0
    %525 = vmatpush1.msra.mxu0 0.0
    %526 = vmatprep.subr.mxu0 0.0
    %527 = vmatpush1.msra.mxu0 0.0
    %528 = vmatprep.mubr.f32.mxu0 0.0
    %529 = vmatmul.mubr.f32.gmra.mrb[0].mxu0 %v417
    %v530 = vpop.f32.mrb[0].mxu0
    %v531 = vadd.f32 0.0, %v530
    %v532 = vpop.f32.mrb[0].mxu0
    %533 = vmatprep.mubr.f32.mxu0 0.0
    %534 = vmatmul.mubr.f32.gmra.mrb[0].mxu0 %v420
    %v535 = vpop.f32.mrb[0].mxu0
    %v536 = vadd.f32 0.0, %v535
    %v537 = vpop.f32.mrb[0].mxu0
    %538 = vmatprep.mubr.f32.mxu0 0.0
    %539 = vmatmul.mubr.f32.gmra.mrb[0].mxu0 %v423
    %v540 = vpop.f32.mrb[0].mxu0
    %v541 = vadd.f32 0.0, %v540
    %v542 = vpop.f32.mrb[0].mxu0
    %543 = vmatprep.mubr.f32.mxu0 0.0
    %544 = vmatmul.mubr.f32.gmra.mrb[0].mxu0 %v426
    %v545 = vpop.f32.mrb[0].mxu0
    %v546 = vadd.f32 0.0, %v545
    %v547 = vpop.f32.mrb[0].mxu0
    %548 = vmatprep.mubr.f32.mxu0 0.0
    %549 = vmatmul.mubr.f32.gmra.mrb[0].mxu0 %v429
    %v550 = vpop.f32.mrb[0].mxu0
    %v551 = vadd.f32 0.0, %v550
    %v552 = vpop.f32.mrb[0].mxu0
    %553 = vmatprep.mubr.f32.mxu0 0.0
    %554 = vmatmul.mubr.f32.gmra.mrb[0].mxu0 %v432
    %v555 = vpop.f32.mrb[0].mxu0
    %v556 = vadd.f32 0.0, %v555
    %v557 = vpop.f32.mrb[0].mxu0
    %558 = vmatprep.mubr.f32.mxu0 0.0
    %559 = vmatmul.mubr.f32.gmra.mrb[0].mxu0 %v435
    %v560 = vpop.f32.mrb[0].mxu0
    %v561 = vadd.f32 0.0, %v560
    %v562 = vpop.f32.mrb[0].mxu0
    %563 = vmatprep.mubr.f32.mxu0 0.0
    %564 = vmatmul.mubr.f32.gmra.mrb[0].mxu0 %v438
    %v565 = vpop.f32.mrb[0].mxu0
    %v566 = vadd.f32 0.0, %v565
    %v567 = vpop.f32.mrb[0].mxu0
    %568 = vmatprep.mubr.f32.mxu0 0.0
    %569 = vmatmul.mubr.f32.gmra.mrb[0].mxu0 %v441
    %v570 = vpop.f32.mrb[0].mxu0
    %v571 = vadd.f32 0.0, %v570
    %v572 = vpop.f32.mrb[0].mxu0
    %573 = vmatprep.mubr.f32.mxu0 0.0
    %574 = vmatmul.mubr.f32.gmra.mrb[0].mxu0 %v444
    %v575 = vpop.f32.mrb[0].mxu0
    %v576 = vadd.f32 0.0, %v575
    %v577 = vpop.f32.mrb[0].mxu0
    %578 = vmatprep.mubr.f32.mxu0 0.0
    %579 = vmatmul.mubr.f32.gmra.mrb[0].mxu0 %v447
    %v580 = vpop.f32.mrb[0].mxu0
    %v581 = vadd.f32 0.0, %v580
    %v582 = vpop.f32.mrb[0].mxu0
    %583 = vmatprep.mubr.f32.mxu0 0.0
    %584 = vmatmul.mubr.f32.gmra.mrb[0].mxu0 %v450
    %v585 = vpop.f32.mrb[0].mxu0
    %v586 = vadd.f32 0.0, %v585
    %v587 = vpop.f32.mrb[0].mxu0
    %588 = vmatprep.mubr.f32.mxu0 0.0
    %589 = vmatmul.mubr.f32.gmra.mrb[0].mxu0 %v453
    %v590 = vpop.f32.mrb[0].mxu0
    %v591 = vadd.f32 0.0, %v590
    %v592 = vpop.f32.mrb[0].mxu0
    %593 = vmatprep.mubr.f32.mxu0 0.0
    %594 = vmatmul.mubr.f32.gmra.mrb[0].mxu0 %v456
    %v595 = vpop.f32.mrb[0].mxu0
    %v596 = vadd.f32 0.0, %v595
    %v597 = vpop.f32.mrb[0].mxu0
    %598 = vmatprep.mubr.f32.mxu0 0.0
    %599 = vmatmul.mubr.f32.gmra.mrb[0].mxu0 %v459
    %v600 = vpop.f32.mrb[0].mxu0
    %v601 = vadd.f32 0.0, %v600
    %v602 = vpop.f32.mrb[0].mxu0
    %603 = vmatprep.mubr.f32.mxu0 0.0
    %604 = vmatmul.mubr.f32.gmra.mrb[0].mxu0 %v462
    %v605 = vpop.f32.mrb[0].mxu0
    %v606 = vadd.f32 0.0, %v605
    %v607 = vpop.f32.mrb[0].mxu0
    %608 = vdwg.mxu0
    %v609 = vlaneseq
    %v610 = vshrl.u32 %v609, 7
    %s611 = smul.u32 0, 8
    %v612 = vstv %s611
    %v613 = vadd.s32 %v610, %v612
    %v614 = vlaneseq
    %v615 = vshrl.u32 %v614, 7
    %v616 = vsub.s32 0, %v615
    %v617 = vrot.slane %v218, %v616
    %vm618 = vcmp.eq.s32.totalorder %v613, %v617
    %v619 = vsel %vm618, 1, 0
    %v620 = vcvt.s32.f32 %v619
    %v621 = vld [vmem:[#allocation3] sm:$0xff]
    %622 = vmatprep.subr.mxu0 0.0
    %623 = vmatpush1.msra.mxu0 %v531
    %624 = vmatprep.subr.mxu0 0.0
    %625 = vmatpush1.msra.mxu0 %v536
    %626 = vmatprep.subr.mxu0 0.0
    %627 = vmatpush1.msra.mxu0 %v541
    %628 = vmatprep.subr.mxu0 0.0
    %629 = vmatpush1.msra.mxu0 %v546
    %630 = vmatprep.subr.mxu0 0.0
    %631 = vmatpush1.msra.mxu0 %v551
    %632 = vmatprep.subr.mxu0 0.0
    %633 = vmatpush1.msra.mxu0 %v556
    %634 = vmatprep.subr.mxu0 0.0
    %635 = vmatpush1.msra.mxu0 %v561
    %636 = vmatprep.subr.mxu0 0.0
    %637 = vmatpush1.msra.mxu0 %v566
    %638 = vmatprep.subr.mxu0 0.0
    %639 = vmatpush1.msra.mxu0 %v571
    %640 = vmatprep.subr.mxu0 0.0
    %641 = vmatpush1.msra.mxu0 %v576
    %642 = vmatprep.subr.mxu0 0.0
    %643 = vmatpush1.msra.mxu0 %v581
    %644 = vmatprep.subr.mxu0 0.0
    %645 = vmatpush1.msra.mxu0 %v586
    %646 = vmatprep.subr.mxu0 0.0
    %647 = vmatpush1.msra.mxu0 %v591
    %648 = vmatprep.subr.mxu0 0.0
    %649 = vmatpush1.msra.mxu0 %v596
    %650 = vmatprep.subr.mxu0 0.0
    %651 = vmatpush1.msra.mxu0 %v601
    %652 = vmatprep.subr.mxu0 0.0
    %653 = vmatpush1.msra.mxu0 %v606
    %654 = vmatprep.subr.mxu0 0.0
    %655 = vmatpush1.msra.mxu0 0.0
    %656 = vmatprep.subr.mxu0 0.0
    %657 = vmatpush1.msra.mxu0 0.0
    %658 = vmatprep.subr.mxu0 0.0
    %659 = vmatpush1.msra.mxu0 0.0
    %660 = vmatprep.subr.mxu0 0.0
    %661 = vmatpush1.msra.mxu0 0.0
    %662 = vmatprep.subr.mxu0 0.0
    %663 = vmatpush1.msra.mxu0 0.0
    %664 = vmatprep.subr.mxu0 0.0
    %665 = vmatpush1.msra.mxu0 0.0
    %666 = vmatprep.subr.mxu0 0.0
    %667 = vmatpush1.msra.mxu0 0.0
    %668 = vmatprep.subr.mxu0 0.0
    %669 = vmatpush1.msra.mxu0 0.0
    %670 = vmatprep.subr.mxu0 0.0
    %671 = vmatpush1.msra.mxu0 0.0
    %672 = vmatprep.subr.mxu0 0.0
    %673 = vmatpush1.msra.mxu0 0.0
    %674 = vmatprep.subr.mxu0 0.0
    %675 = vmatpush1.msra.mxu0 0.0
    %676 = vmatprep.subr.mxu0 0.0
    %677 = vmatpush1.msra.mxu0 0.0
    %678 = vmatprep.subr.mxu0 0.0
    %679 = vmatpush1.msra.mxu0 0.0
    %680 = vmatprep.subr.mxu0 0.0
    %681 = vmatpush1.msra.mxu0 0.0
    %682 = vmatprep.subr.mxu0 0.0
    %683 = vmatpush1.msra.mxu0 0.0
    %684 = vmatprep.subr.mxu0 0.0
    %685 = vmatpush1.msra.mxu0 0.0
    %686 = vmatprep.mubr.f32.mxu0 0.0
    %687 = vmatmul.mubr.f32.gmra.mrb[0].mxu0 %v620
    %v688 = vpop.f32.mrb[0].mxu0
    %v689 = vadd.f32 0.0, %v688
    %v690 = vpop.f32.mrb[0].mxu0
    %691 = vdwg.mxu0
    %v692 = vadd.f32 %v621, %v689
    %693 = vst [vmem:[#allocation3] sm:$0xff] %v692
    %v694 = vld [vmem:[#allocation4] sm:$0xff]
    %695 = vadd.xlane.f32.xlu0 %v620
    %v696 = vpop.xlane.xlu0 %695
    %v697 = vadd.f32 %v694, %v696
    %vm698 = vcmask 7168
    %699 = vst.msk [vmem:[#allocation4] sm:$0xff] %vm698, %v697
    // Predicated region
    $region30: #{gnn_forward.1} parent=1 // pred_check
      %p700 = pneg %p24
    $region31: #{gnn_forward.1} parent=1 // pred_check_branch
      %702 = sbr.rel (%p700) target = $region33
    $region32: #{gnn_forward.1} parent=1 // pred_region
      %v703 = vld [vmem:[#allocation3] sm:$0xff]
      %v704 = vld [vmem:[#allocation4] sm:$0xff]
      %v705 = vld [vmem:[%s5] sm:$0x1]
      %707 = vset.pattern.permute.xlu0 0
      %708 = vperm.xlu0 %707, %v704
      %v709 = vpop.permute.xlu0 %708
      %v712 = vlaneseq
      %v713 = vshrl.u32 %v712, 7
      %v714 = vsub.s32 0, %v713
      %v715 = vrot.slane %v705, %v714
      %v717 = vmul.f32 %v709, %v715
      %v718 = vadd.f32 %v703, %v717
      %719 = vst [vmem:[#allocation5] sm:$0xff] %v718
    $region33: #{gnn_forward.1} parent=1 // pred_fallthru
      _
    // Predicated region
    $region34: #{gnn_forward.1} parent=1 // pred_check
      _
    $region35: #{gnn_forward.1} parent=1 // pred_check_branch
      %721 = sbr.rel (0) target = $region37
    $region36: #{gnn_forward.1} parent=1 // pred_region
      %s723 = ssub.s32 128, 128
      %724 = vsyncadd [#allocation6], %s723
      %s726 = sshll.u32 [#allocation5], 4
      %s727 = int_to_ptr.vmem [resolvable:$true] %s726
      %729 = dma.vmem_to_hbm [thread:$0]  %s727, 128, %s6, [#allocation6]
    $region37: #{gnn_forward.1} parent=1 // pred_fallthru
      _
    // Predicated region
    $region38: #{gnn_forward.1} parent=1 // pred_check
      _
    $region39: #{gnn_forward.1} parent=1 // pred_check_branch
      %731 = sbr.rel (0) target = $region41
    $region40: #{gnn_forward.1} parent=1 // pred_region
      %732 = dma.done [#allocation6], 128
    $region41: #{gnn_forward.1} parent=1 // pred_fallthru
      _
    %733 = vsyncpa [#allocation6], 1

</llo_original>
